<compile_context>
chip_gen: v6e
topology: v6e:2x2x1
jax: 0.10.0
libtpu: 0.0.40
codegen_flags: <defaults>
</compile_context>

<pallas_src>
import functools

import jax
import jax.numpy as jnp
from jax import lax
from jax.experimental import pallas as pl
from jax.experimental.pallas import tpu as pltpu


def _round_up(v: int, m: int) -> int:
    return (v + m - 1) // m * m


# ----------------------------------------------------------------------------- kernel
def _ocr_kernel(wc_ref, bc_ref, x_ref, w1t_ref, b1_ref, w2t_ref, b2_ref,
                o_ref, xs_ref, conv_ref, acc_ref, *, n_classes: int):
    k = pl.program_id(0)
    nk = pl.num_programs(0)

    B, HW = x_ref.shape                 # original (un-padded) sizes
    M_pad, HW_pad = conv_ref.shape      # aligned matmul-M / K sizes
    TK = w1t_ref.shape[0]               # K slab streamed per grid step

    # --- step 0: zero-pad image, 3x3 conv, accumulator init --------------------
    @pl.when(k == 0)
    def _prologue():
        # conv zero padding folded into a pre-zeroed, lane-aligned VMEM scratch;
        # the image lives at rows [1, 1+B) so the row taps are simple slices.
        xs_ref[...] = jnp.zeros_like(xs_ref)
        xs_ref[1:1 + B, :HW] = x_ref[...]

        x_u = xs_ref[0:M_pad, :]            # x[i-1, :]  (row 0 -> zero pad)
        x_c = xs_ref[1:1 + M_pad, :]        # x[i,   :]
        x_d = xs_ref[2:2 + M_pad, :]        # x[i+1, :]  (row B-1 -> zero pad)

        # per-column-tap row mixes (VPU FMAs); wc layout is w[a*3 + b], a = row tap.
        z0 = wc_ref[0] * x_u + wc_ref[3] * x_c + wc_ref[6] * x_d   # col tap j-1
        z1 = wc_ref[1] * x_u + wc_ref[4] * x_c + wc_ref[7] * x_d   # col tap j
        z2 = wc_ref[2] * x_u + wc_ref[5] * x_c + wc_ref[8] * x_d   # col tap j+1

        # +-1 column shifts as lane rotations (XLU) + edge masks (= conv padding).
        col = lax.broadcasted_iota(jnp.int32, (M_pad, HW_pad), 1)
        z0s = jnp.where(col == 0, 0.0, pltpu.roll(z0, 1, axis=1))
        z2s = jnp.where(col == HW - 1, 0.0, pltpu.roll(z2, HW_pad - 1, axis=1))

        conv = z0s + z1 + z2s + bc_ref[0]
        conv_ref[...] = conv.astype(conv_ref.dtype)        # bf16 MXU lhs
        acc_ref[...] = jnp.zeros_like(acc_ref)

    # --- every step: accumulate one K-slab of the first Linear (bf16 MXU, f32 acc)
    off = pl.multiple_of(k * TK, TK)
    acc_ref[...] += jnp.dot(conv_ref[:, pl.ds(off, TK)], w1t_ref[...],
                            preferred_element_type=jnp.float32)

    # --- last step: bias + ReLU + second Linear + masked LogSoftmax ------------
    @pl.when(k == nk - 1)
    def _epilogue():
        h = jnp.maximum(acc_ref[...] + b1_ref[...], 0.0).astype(w2t_ref.dtype)
        logits = jnp.dot(h, w2t_ref[...],
                         preferred_element_type=jnp.float32) + b2_ref[...]
        # mask padded class lanes out of the softmax normalizer
        ccol = lax.broadcasted_iota(jnp.int32, logits.shape, 1)
        logits = jnp.where(ccol < n_classes, logits, -jnp.inf)
        m = jnp.max(logits, axis=1, keepdims=True)
        z = logits - m
        lse = jnp.log(jnp.sum(jnp.exp(z), axis=1, keepdims=True))
        o_ref[...] = z - lse                               # lane-dense (M_pad, 128) store


# ----------------------------------------------------------------------------- wrapper
def ocr_forward_pallas(x, params):
    B, H, W = x.shape
    HW = H * W
    hsize = HW // 2
    n_classes = params["w2"].shape[0]

    # aligned sizes
    M_pad = max(_round_up(B, 8), 8)          # matmul M / sublanes
    HW_pad = _round_up(HW, 128)              # K / lanes
    HS_pad = _round_up(hsize, 128)
    C_pad = _round_up(n_classes, 128)
    # K tile for streaming W1^T (bf16) through VMEM
    TK = 512 if (HW_pad % 512 == 0 and HW_pad >= 2048) else 128
    nk = HW_pad // TK

    x2d = x.reshape(B, HW).astype(jnp.float32)

    wc = params["conv_w"].reshape(9).astype(jnp.float32)            # SMEM scalars
    bc = params["conv_b"].reshape(1).astype(jnp.float32)
    w1t = jnp.pad(params["w1"].T.astype(jnp.bfloat16),
                  ((0, HW_pad - HW), (0, HS_pad - hsize)))           # (HW_pad, HS_pad)
    b1 = jnp.pad(params["b1"].astype(jnp.float32),
                 (0, HS_pad - hsize)).reshape(1, HS_pad)
    w2t = jnp.pad(params["w2"].T.astype(jnp.bfloat16),
                  ((0, HS_pad - hsize), (0, C_pad - n_classes)))     # (HS_pad, C_pad)
    b2 = jnp.pad(params["b2"].astype(jnp.float32),
                 (0, C_pad - n_classes)).reshape(1, C_pad)

    grid_spec = pltpu.PrefetchScalarGridSpec(
        num_scalar_prefetch=0,
        grid=(nk,),
        in_specs=[
            pl.BlockSpec(memory_space=pltpu.MemorySpace.SMEM),       # conv w (9,)
            pl.BlockSpec(memory_space=pltpu.MemorySpace.SMEM),       # conv b (1,)
            pl.BlockSpec((B, HW), lambda k: (0, 0)),                 # image (resident)
            pl.BlockSpec((TK, HS_pad), lambda k: (k, 0)),            # streamed W1^T slab
            pl.BlockSpec((1, HS_pad), lambda k: (0, 0)),             # b1
            pl.BlockSpec((HS_pad, C_pad), lambda k: (0, 0)),         # W2^T (resident)
            pl.BlockSpec((1, C_pad), lambda k: (0, 0)),              # b2
        ],
        out_specs=pl.BlockSpec((M_pad, C_pad), lambda k: (0, 0)),    # lane-dense out
        scratch_shapes=[
            pltpu.VMEM((M_pad + 8, HW_pad), jnp.float32),   # zero-padded image
            pltpu.VMEM((M_pad, HW_pad), jnp.bfloat16),      # conv output (MXU lhs)
            pltpu.VMEM((M_pad, HS_pad), jnp.float32),       # f32 accumulator
        ],
    )

    # explicit VMEM budget: double-buffered streamed slabs + residents + scratch
    vmem_est = (2 * 2 * TK * HS_pad                      # 2x bf16 W1^T slabs
                + 2 * HS_pad * C_pad                     # W2^T (bf16)
                + 4 * (B * HW + (M_pad + 8) * HW_pad)    # image + padded scratch
                + 2 * M_pad * HW_pad                     # conv scratch (bf16)
                + 4 * (M_pad * HS_pad + M_pad * C_pad)   # accumulator + out
                + 4 * (HS_pad + C_pad))                  # biases
    vmem_limit = int(min(56 * 2**20, max(32 * 2**20, 2 * vmem_est)))

    cost = pl.CostEstimate(
        flops=int(2 * M_pad * HW_pad * HS_pad + 2 * M_pad * HS_pad * C_pad
                  + 18 * M_pad * HW_pad),
        transcendentals=int(M_pad * C_pad),
        bytes_accessed=int(4 * B * HW + 2 * HW_pad * HS_pad + 2 * HS_pad * C_pad
                           + 4 * (HS_pad + C_pad) + 4 * M_pad * C_pad),
    )

    kernel = functools.partial(_ocr_kernel, n_classes=n_classes)

    out = pl.pallas_call(
        kernel,
        out_shape=jax.ShapeDtypeStruct((M_pad, C_pad), jnp.float32),
        grid_spec=grid_spec,
        compiler_params=pltpu.CompilerParams(
            # single reduction (K) axis; for large batches a leading "parallel"
            # M axis would additionally shard across v7x's two TensorCores.
            dimension_semantics=("arbitrary",),
            vmem_limit_bytes=vmem_limit,
        ),
        cost_estimate=cost,
    )(wc, bc, x2d, w1t, b1, w2t, b2)

    return out[:B, :n_classes]


# ----------------------------------------------------------------------------- pure-JAX reference
def ocr_forward_ref(x, params):
    B, H, W = x.shape
    HW = H * W
    img = x.reshape(1, 1, B, HW).astype(jnp.float32)            # NCHW, single image
    conv = lax.conv_general_dilated(
        img, params["conv_w"].astype(jnp.float32),
        window_strides=(1, 1), padding=((1, 1), (1, 1)),
        dimension_numbers=("NCHW", "OIHW", "NCHW")) + params["conv_b"]
    feat = conv.reshape(B, HW)
    h = jnp.maximum(feat @ params["w1"].T + params["b1"], 0.0)
    logits = h @ params["w2"].T + params["b2"]
    return jax.nn.log_softmax(logits, axis=1)


# ----------------------------------------------------------------------------- module-like wrapper
class OCRModelPallas:
    def __init__(self, n_classes, img_dims, idx_to_char, key):
        self.img_dims = img_dims
        self.input_size = img_dims[0] * img_dims[1]
        self.hsize_1 = self.input_size // 2
        self.output_size = n_classes
        self.idx_to_char = idx_to_char
        k = jax.random.split(key, 6)
        s = 0.05
        self.params = {
            "conv_w": s * jax.random.normal(k[0], (1, 1, 3, 3), jnp.float32),
            "conv_b": s * jax.random.normal(k[1], (1,), jnp.float32),
            "w1": s * jax.random.normal(k[2], (self.hsize_1, self.input_size), jnp.float32),
            "b1": s * jax.random.normal(k[3], (self.hsize_1,), jnp.float32),
            "w2": s * jax.random.normal(k[4], (n_classes, self.hsize_1), jnp.float32),
            "b2": s * jax.random.normal(k[5], (n_classes,), jnp.float32),
        }

    def forward(self, X, mode=None):
        preds = ocr_forward_pallas(X, self.params)
        if mode == "train":
            return preds
        # non-'train' mode: host-side Python char lookup, matches torch int(preds.argmax())
        return self.idx_to_char(int(jnp.argmax(preds)))


# ----------------------------------------------------------------------------- main
if __name__ == "__main__":
    key = jax.random.PRNGKey(0)
    kx, kp = jax.random.split(key)

    B, H, W = 2, 16, 16
    n_classes = 26
    X = jax.random.uniform(kx, (B, H, W), jnp.float32)

    model = OCRModelPallas(n_classes, (H, W),
                           idx_to_char=lambda i: chr(ord("a") + i % 26),
                           key=kp)

    preds = model.forward(X, mode="train")
    preds = jax.block_until_ready(preds)

    ref = ocr_forward_ref(X, model.params)
    assert preds.shape == (B, n_classes)
    # bf16 MXU inputs (f32 accumulation) -> loosen tolerance vs the f32 reference
    max_err = float(jnp.max(jnp.abs(preds - ref)))
    assert jnp.allclose(preds, ref, atol=2e-2, rtol=2e-2), f"mismatch vs ref (max|d|={max_err})"

    # inference path (string output, outside the kernel)
    _ = model.forward(X, mode=None)

    print("KERNEL_OK")
</pallas_src>

<mosaic_0001>
module attributes {stable_mosaic.version = 11 : i64} {
  func.func @_ocr_kernel(%arg0: i32, %arg1: memref<9xf32, #tpu.memory_space<smem>>, %arg2: memref<1xf32, #tpu.memory_space<smem>>, %arg3: memref<2x256xf32, #tpu.memory_space<vmem>>, %arg4: memref<128x128xbf16, #tpu.memory_space<vmem>>, %arg5: memref<1x128xf32, #tpu.memory_space<vmem>>, %arg6: memref<128x128xbf16, #tpu.memory_space<vmem>>, %arg7: memref<1x128xf32, #tpu.memory_space<vmem>>, %arg8: memref<8x128xf32, #tpu.memory_space<vmem>>, %arg9: memref<16x256xf32, #tpu.memory_space<vmem>>, %arg10: memref<8x256xbf16, #tpu.memory_space<vmem>>, %arg11: memref<8x128xf32, #tpu.memory_space<vmem>>) attributes {dimension_semantics = [#tpu.dimension_semantics<arbitrary>], iteration_bounds = array<i64: 2>, scalar_prefetch = 0 : i64, scratch_operands = 3 : i64, tpu.core_type = #tpu.core_type<tc>, window_params = [{transform_indices = @transform_0, window_bounds = array<i64: 9>}, {transform_indices = @transform_1, window_bounds = array<i64: 1>}, {pipeline_mode = #tpu.pipeline_mode<synchronous>, transform_indices = @transform_2, window_bounds = array<i64: 2, 256>}, {transform_indices = @transform_3, window_bounds = array<i64: 128, 128>}, {pipeline_mode = #tpu.pipeline_mode<synchronous>, transform_indices = @transform_4, window_bounds = array<i64: 1, 128>}, {pipeline_mode = #tpu.pipeline_mode<synchronous>, transform_indices = @transform_5, window_bounds = array<i64: 128, 128>}, {pipeline_mode = #tpu.pipeline_mode<synchronous>, transform_indices = @transform_6, window_bounds = array<i64: 1, 128>}, {pipeline_mode = #tpu.pipeline_mode<synchronous>, transform_indices = @transform_7, window_bounds = array<i64: 8, 128>}]} {
    %c0_i32 = arith.constant 0 : i32
    %0 = arith.cmpi eq, %arg0, %c0_i32 : i32
    %1 = arith.extui %0 : i1 to i32
    %c0_i32_0 = arith.constant 0 : i32
    %2 = arith.cmpi ne, %1, %c0_i32_0 : i32
    scf.if %2 {
      %cst_8 = arith.constant 0.000000e+00 : f32
      %15 = vector.broadcast %cst_8 : f32 to vector<16x256xf32>
      %c0_9 = arith.constant 0 : index
      %c0_10 = arith.constant 0 : index
      %16 = vector.load %arg9[%c0_9, %c0_10] : memref<16x256xf32, #tpu.memory_space<vmem>>, vector<16x256xf32>
      tpu.vector_store %arg9[%c0_9, %c0_10], %15 {strides = array<i32>} : memref<16x256xf32, #tpu.memory_space<vmem>>, vector<16x256xf32>,
      %c0_11 = arith.constant 0 : index
      %c0_12 = arith.constant 0 : index
      %17 = vector.load %arg3[%c0_11, %c0_12] : memref<2x256xf32, #tpu.memory_space<vmem>>, vector<2x256xf32>
      %c1 = arith.constant 1 : index
      %c0_13 = arith.constant 0 : index
      %18 = vector.load %arg9[%c1, %c0_13] : memref<16x256xf32, #tpu.memory_space<vmem>>, vector<2x256xf32>
      tpu.vector_store %arg9[%c1, %c0_13], %17 {strides = array<i32>} : memref<16x256xf32, #tpu.memory_space<vmem>>, vector<2x256xf32>,
      %c0_14 = arith.constant 0 : index
      %c0_15 = arith.constant 0 : index
      %19 = vector.load %arg9[%c0_14, %c0_15] : memref<16x256xf32, #tpu.memory_space<vmem>>, vector<8x256xf32>
      %c1_16 = arith.constant 1 : index
      %c0_17 = arith.constant 0 : index
      %20 = vector.load %arg9[%c1_16, %c0_17] : memref<16x256xf32, #tpu.memory_space<vmem>>, vector<8x256xf32>
      %c2 = arith.constant 2 : index
      %c0_18 = arith.constant 0 : index
      %21 = vector.load %arg9[%c2, %c0_18] : memref<16x256xf32, #tpu.memory_space<vmem>>, vector<8x256xf32>
      %c0_19 = arith.constant 0 : index
      %22 = memref.load %arg1[%c0_19] : memref<9xf32, #tpu.memory_space<smem>>
      %23 = vector.broadcast %22 : f32 to vector<8x256xf32>
      %24 = arith.mulf %23, %19 : vector<8x256xf32>
      %c3 = arith.constant 3 : index
      %25 = memref.load %arg1[%c3] : memref<9xf32, #tpu.memory_space<smem>>
      %26 = vector.broadcast %25 : f32 to vector<8x256xf32>
      %27 = arith.mulf %26, %20 : vector<8x256xf32>
      %28 = arith.addf %24, %27 : vector<8x256xf32>
      %c6 = arith.constant 6 : index
      %29 = memref.load %arg1[%c6] : memref<9xf32, #tpu.memory_space<smem>>
      %30 = vector.broadcast %29 : f32 to vector<8x256xf32>
      %31 = arith.mulf %30, %21 : vector<8x256xf32>
      %32 = arith.addf %28, %31 : vector<8x256xf32>
      %c1_20 = arith.constant 1 : index
      %33 = memref.load %arg1[%c1_20] : memref<9xf32, #tpu.memory_space<smem>>
      %34 = vector.broadcast %33 : f32 to vector<8x256xf32>
      %35 = arith.mulf %34, %19 : vector<8x256xf32>
      %c4 = arith.constant 4 : index
      %36 = memref.load %arg1[%c4] : memref<9xf32, #tpu.memory_space<smem>>
      %37 = vector.broadcast %36 : f32 to vector<8x256xf32>
      %38 = arith.mulf %37, %20 : vector<8x256xf32>
      %39 = arith.addf %35, %38 : vector<8x256xf32>
      %c7 = arith.constant 7 : index
      %40 = memref.load %arg1[%c7] : memref<9xf32, #tpu.memory_space<smem>>
      %41 = vector.broadcast %40 : f32 to vector<8x256xf32>
      %42 = arith.mulf %41, %21 : vector<8x256xf32>
      %43 = arith.addf %39, %42 : vector<8x256xf32>
      %c2_21 = arith.constant 2 : index
      %44 = memref.load %arg1[%c2_21] : memref<9xf32, #tpu.memory_space<smem>>
      %45 = vector.broadcast %44 : f32 to vector<8x256xf32>
      %46 = arith.mulf %45, %19 : vector<8x256xf32>
      %c5 = arith.constant 5 : index
      %47 = memref.load %arg1[%c5] : memref<9xf32, #tpu.memory_space<smem>>
      %48 = vector.broadcast %47 : f32 to vector<8x256xf32>
      %49 = arith.mulf %48, %20 : vector<8x256xf32>
      %50 = arith.addf %46, %49 : vector<8x256xf32>
      %c8 = arith.constant 8 : index
      %51 = memref.load %arg1[%c8] : memref<9xf32, #tpu.memory_space<smem>>
      %52 = vector.broadcast %51 : f32 to vector<8x256xf32>
      %53 = arith.mulf %52, %21 : vector<8x256xf32>
      %54 = arith.addf %50, %53 : vector<8x256xf32>
      %55 = tpu.iota {dimensions = array<i32: 1>} : vector<8x256xi32>
      %c0_i32_22 = arith.constant 0 : i32
      %56 = vector.broadcast %c0_i32_22 : i32 to vector<8x256xi32>
      %57 = arith.cmpi eq, %55, %56 : vector<8x256xi32>
      %c1_i32_23 = arith.constant 1 : i32
      %58 = tpu.dynamic_rotate %32 by %c1_i32_23 dim 1 : vector<8x256xf32>, i32 -> vector<8x256xf32>
      %cst_24 = arith.constant 0.000000e+00 : f32
      %59 = vector.broadcast %cst_24 : f32 to vector<8x256xf32>
      %60 = arith.select %57, %59, %58 : vector<8x256xi1>, vector<8x256xf32>
      %c255_i32 = arith.constant 255 : i32
      %61 = vector.broadcast %c255_i32 : i32 to vector<8x256xi32>
      %62 = arith.cmpi eq, %55, %61 : vector<8x256xi32>
      %c255_i32_25 = arith.constant 255 : i32
      %63 = tpu.dynamic_rotate %54 by %c255_i32_25 dim 1 : vector<8x256xf32>, i32 -> vector<8x256xf32>
      %cst_26 = arith.constant 0.000000e+00 : f32
      %64 = vector.broadcast %cst_26 : f32 to vector<8x256xf32>
      %65 = arith.select %62, %64, %63 : vector<8x256xi1>, vector<8x256xf32>
      %66 = arith.addf %60, %43 : vector<8x256xf32>
      %67 = arith.addf %66, %65 : vector<8x256xf32>
      %c0_27 = arith.constant 0 : index
      %68 = memref.load %arg2[%c0_27] : memref<1xf32, #tpu.memory_space<smem>>
      %69 = vector.broadcast %68 : f32 to vector<8x256xf32>
      %70 = arith.addf %67, %69 : vector<8x256xf32>
      %71 = arith.truncf %70 : vector<8x256xf32> to vector<8x256xbf16>
      %c0_28 = arith.constant 0 : index
      %c0_29 = arith.constant 0 : index
      %72 = vector.load %arg10[%c0_28, %c0_29] : memref<8x256xbf16, #tpu.memory_space<vmem>>, vector<8x256xbf16>
      tpu.vector_store %arg10[%c0_28, %c0_29], %71 {strides = array<i32>} : memref<8x256xbf16, #tpu.memory_space<vmem>>, vector<8x256xbf16>,
      %cst_30 = arith.constant 0.000000e+00 : f32
      %73 = vector.broadcast %cst_30 : f32 to vector<8x128xf32>
      %c0_31 = arith.constant 0 : index
      %c0_32 = arith.constant 0 : index
      %74 = vector.load %arg11[%c0_31, %c0_32] : memref<8x128xf32, #tpu.memory_space<vmem>>, vector<8x128xf32>
      tpu.vector_store %arg11[%c0_31, %c0_32], %73 {strides = array<i32>} : memref<8x128xf32, #tpu.memory_space<vmem>>, vector<8x128xf32>,
    } else {
    }
    %c128_i32 = arith.constant 128 : i32
    %3 = arith.muli %arg0, %c128_i32 : i32
    %4 = tpu.assume_multiple %3, 128 : i32
    %c0 = arith.constant 0 : index
    %c0_1 = arith.constant 0 : index
    %5 = vector.load %arg11[%c0, %c0_1] : memref<8x128xf32, #tpu.memory_space<vmem>>, vector<8x128xf32>
    %c0_2 = arith.constant 0 : index
    %6 = arith.index_cast %4 : i32 to index
    %7 = vector.load %arg10[%c0_2, %6] : memref<8x256xbf16, #tpu.memory_space<vmem>>, vector<8x128xbf16>
    %c0_3 = arith.constant 0 : index
    %c0_4 = arith.constant 0 : index
    %8 = vector.load %arg4[%c0_3, %c0_4] : memref<128x128xbf16, #tpu.memory_space<vmem>>, vector<128x128xbf16>
    %cst = arith.constant dense<0.000000e+00> : vector<8x128xf32>
    %9 = tpu.matmul %7, %8, %cst {dimension_numbers = #tpu.dot_dimension_numbers<[1], [0], [0], [1], [0, 0, 1, 1], [], []>} : vector<8x128xbf16>, vector<128x128xbf16>, vector<8x128xf32> -> vector<8x128xf32>
    %10 = arith.addf %5, %9 : vector<8x128xf32>
    %c0_5 = arith.constant 0 : index
    %c0_6 = arith.constant 0 : index
    %11 = vector.load %arg11[%c0_5, %c0_6] : memref<8x128xf32, #tpu.memory_space<vmem>>, vector<8x128xf32>
    tpu.vector_store %arg11[%c0_5, %c0_6], %10 {strides = array<i32>} : memref<8x128xf32, #tpu.memory_space<vmem>>, vector<8x128xf32>,
    %c1_i32 = arith.constant 1 : i32
    %12 = arith.cmpi eq, %arg0, %c1_i32 : i32
    %13 = arith.extui %12 : i1 to i32
    %c0_i32_7 = arith.constant 0 : i32
    %14 = arith.cmpi ne, %13, %c0_i32_7 : i32
    scf.if %14 {
      %c0_8 = arith.constant 0 : index
      %c0_9 = arith.constant 0 : index
      %15 = vector.load %arg11[%c0_8, %c0_9] : memref<8x128xf32, #tpu.memory_space<vmem>>, vector<8x128xf32>
      %c0_10 = arith.constant 0 : index
      %c0_11 = arith.constant 0 : index
      %16 = vector.load %arg5[%c0_10, %c0_11] : memref<1x128xf32, #tpu.memory_space<vmem>>, vector<1x128xf32>
      %17 = vector.broadcast %16 : vector<1x128xf32> to vector<8x128xf32>
      %18 = arith.addf %15, %17 : vector<8x128xf32>
      %cst_12 = arith.constant 0.000000e+00 : f32
      %19 = vector.broadcast %cst_12 : f32 to vector<8x128xf32>
      %20 = arith.maximumf %18, %19 : vector<8x128xf32>
      %21 = arith.truncf %20 : vector<8x128xf32> to vector<8x128xbf16>
      %c0_13 = arith.constant 0 : index
      %c0_14 = arith.constant 0 : index
      %22 = vector.load %arg6[%c0_13, %c0_14] : memref<128x128xbf16, #tpu.memory_space<vmem>>, vector<128x128xbf16>
      %cst_15 = arith.constant dense<0.000000e+00> : vector<8x128xf32>
      %23 = tpu.matmul %21, %22, %cst_15 {dimension_numbers = #tpu.dot_dimension_numbers<[1], [0], [0], [1], [0, 0, 1, 1], [], []>} : vector<8x128xbf16>, vector<128x128xbf16>, vector<8x128xf32> -> vector<8x128xf32>
      %c0_16 = arith.constant 0 : index
      %c0_17 = arith.constant 0 : index
      %24 = vector.load %arg7[%c0_16, %c0_17] : memref<1x128xf32, #tpu.memory_space<vmem>>, vector<1x128xf32>
      %25 = vector.broadcast %24 : vector<1x128xf32> to vector<8x128xf32>
      %26 = arith.addf %23, %25 : vector<8x128xf32>
      %27 = tpu.iota {dimensions = array<i32: 1>} : vector<8x128xi32>
      %c26_i32 = arith.constant 26 : i32
      %28 = vector.broadcast %c26_i32 : i32 to vector<8x128xi32>
      %29 = arith.cmpi slt, %27, %28 : vector<8x128xi32>
      %cst_18 = arith.constant 0xFF800000 : f32
      %30 = vector.broadcast %cst_18 : f32 to vector<8x128xf32>
      %31 = arith.select %29, %26, %30 : vector<8x128xi1>, vector<8x128xf32>
      %cst_19 = arith.constant dense<0xFF800000> : vector<8xf32>
      %32 = vector.multi_reduction <maximumf>, %31, %cst_19 [1] : vector<8x128xf32> to vector<8xf32>
      %33 = vector.shape_cast %32 : vector<8xf32> to vector<8x1xf32>
      %34 = vector.broadcast %33 : vector<8x1xf32> to vector<8x128xf32>
      %35 = arith.subf %31, %34 : vector<8x128xf32>
      %36 = math.exp %35 : vector<8x128xf32>
      %cst_20 = arith.constant dense<0.000000e+00> : vector<8xf32>
      %37 = vector.multi_reduction <add>, %36, %cst_20 [1] : vector<8x128xf32> to vector<8xf32>
      %38 = vector.shape_cast %37 : vector<8xf32> to vector<8x1xf32>
      %39 = math.log %38 : vector<8x1xf32>
      %40 = vector.broadcast %39 : vector<8x1xf32> to vector<8x128xf32>
      %41 = arith.subf %35, %40 : vector<8x128xf32>
      %c0_21 = arith.constant 0 : index
      %c0_22 = arith.constant 0 : index
      %42 = vector.load %arg8[%c0_21, %c0_22] : memref<8x128xf32, #tpu.memory_space<vmem>>, vector<8x128xf32>
      tpu.vector_store %arg8[%c0_21, %c0_22], %41 {strides = array<i32>} : memref<8x128xf32, #tpu.memory_space<vmem>>, vector<8x128xf32>,
    } else {
    }
    return
  }
  func.func @transform_0(%arg0: i32) -> i32 {
    %c0_i32 = arith.constant 0 : i32
    %c0_i32_0 = arith.constant 0 : i32
    return %c0_i32 : i32
  }
  func.func @transform_1(%arg0: i32) -> i32 {
    %c0_i32 = arith.constant 0 : i32
    %c0_i32_0 = arith.constant 0 : i32
    return %c0_i32 : i32
  }
  func.func @transform_2(%arg0: i32) -> (i32, i32) {
    %c0_i32 = arith.constant 0 : i32
    %c0_i32_0 = arith.constant 0 : i32
    %c0_i32_1 = arith.constant 0 : i32
    return %c0_i32, %c0_i32_0 : i32, i32
  }
  func.func @transform_3(%arg0: i32) -> (i32, i32) {
    %c0_i32 = arith.constant 0 : i32
    %c0_i32_0 = arith.constant 0 : i32
    return %arg0, %c0_i32 : i32, i32
  }
  func.func @transform_4(%arg0: i32) -> (i32, i32) {
    %c0_i32 = arith.constant 0 : i32
    %c0_i32_0 = arith.constant 0 : i32
    %c0_i32_1 = arith.constant 0 : i32
    return %c0_i32, %c0_i32_0 : i32, i32
  }
  func.func @transform_5(%arg0: i32) -> (i32, i32) {
    %c0_i32 = arith.constant 0 : i32
    %c0_i32_0 = arith.constant 0 : i32
    %c0_i32_1 = arith.constant 0 : i32
    return %c0_i32, %c0_i32_0 : i32, i32
  }
  func.func @transform_6(%arg0: i32) -> (i32, i32) {
    %c0_i32 = arith.constant 0 : i32
    %c0_i32_0 = arith.constant 0 : i32
    %c0_i32_1 = arith.constant 0 : i32
    return %c0_i32, %c0_i32_0 : i32, i32
  }
  func.func @transform_7(%arg0: i32) -> (i32, i32) {
    %c0_i32 = arith.constant 0 : i32
    %c0_i32_0 = arith.constant 0 : i32
    %c0_i32_1 = arith.constant 0 : i32
    return %c0_i32, %c0_i32_0 : i32, i32
  }
}

</mosaic_0001>

<llo_original>
// kernel: tpu_custom_call.1
$region0: #{tpu_custom_call.1}
  #allocation0 [shape = 'u32[]', space=smem, size = 0x4, offset = 0x4, fixed_abs, tag = 'smem constant byte address 0x4 - core index']
  #allocation1 [shape = 'u32[144,128]{1,0:T(1,128)}', space=vmem, size = 0x12000, scoped, tag = 'internal scratch']
  #allocation2 [shape = 'f32[16,256]{1,0:T(8,128)}', space=vmem, size = 0x4000, scoped, tag = 'scratch operand']
  #allocation3 [shape = 'bf16[8,256]{1,0:T(8,128)(2,1)}', space=vmem, size = 0x1000, scoped, tag = 'scratch operand']
  #allocation4 [shape = 'f32[8,128]{1,0:T(8,128)}', space=vmem, size = 0x1000, scoped, tag = 'scratch operand']
  #allocation5 [shape = 'f32[1]{0:T(128)S(6)}', space=smem, size = 0x200, scoped, tag = 'scoped memory for tpu_custom_call.1']
  %s0 = inlined_call_operand.vmem [shape: f32[9], index: 0, kind: input, shape index: {}]
  %s1 = inlined_call_operand.<no memory space> [shape: f32[1], index: 1, kind: input, shape index: {}]
  %s2 = inlined_call_operand.hbm [shape: f32[2,256], index: 2, kind: input, shape index: {}]
  %s3 = inlined_call_operand.hbm [shape: bf16[256,128], index: 3, kind: input, shape index: {}]
  %s4 = inlined_call_operand.vmem [shape: f32[1,128], index: 4, kind: input, shape index: {}]
  %s5 = inlined_call_operand.hbm [shape: bf16[128,128], index: 5, kind: input, shape index: {}]
  %s6 = inlined_call_operand.vmem [shape: f32[1,128], index: 6, kind: input, shape index: {}]
  %s7 = inlined_call_operand.hbm [shape: f32[8,128], index: 7, kind: output, shape index: {}]
  %s8 = sld [smem:[#allocation0]]
  $region85: #{tpu_custom_call.1} parent=0
    _
  %s10 = ssub.s32 1, %s8
  %s11 = scalar_select 0, %s10, %s8
  %12 = sst [smem:[#allocation5]] %s1
  $region1: #{tpu_custom_call.1} parent=0
    #allocation6 [shape = 'u8[512]{0}', space=smem, size = 0x200, scoped, tag = 'input window, operand 0, single buffered']
    #allocation7 [shape = 's32[2]{0}', space=sflag, size = 0x8, scoped, tag = 'scoped memory for tpu_custom_call.1']
    #allocation8 [shape = 's32[2]{0}', space=sflag, size = 0x8, scoped, tag = 'scoped memory for tpu_custom_call.1']
    #allocation9 [shape = 's32[2]{0}', space=sflag, size = 0x8, scoped, tag = 'scoped memory for tpu_custom_call.1']
    #allocation10 [shape = 'u8[2048]{0}', space=vmem, size = 0x800, scoped, tag = 'input window, operand 2, single buffered']
    #allocation11 [shape = 'u8[65536]{0}', space=vmem, size = 0x10000, scoped, tag = 'input window, operand 3']
    #allocation12 [shape = 's32[2]{0}', space=sflag, size = 0x8, scoped, tag = 'scoped memory for tpu_custom_call.1']
    #allocation13 [shape = 'u8[32768]{0}', space=vmem, size = 0x8000, scoped, tag = 'input window, operand 5, single buffered']
    #allocation14 [shape = 'u8[4096]{0}', space=vmem, size = 0x1000, scoped, tag = 'output window, operand 0, single buffered']
    %13 = vsyncpa [#allocation9], 0
    %14 = vsyncpa [#allocation7], 0
    %15 = vsyncpa [#allocation12], 0
    %s16 = scalar_lea.sflag [#allocation12], 1
    %17 = vsyncpa %s16, 0
    %18 = vsyncpa [#allocation8], 0
    loop: start=0, step=1, limit=4
    $region2: #{tpu_custom_call.1} parent=1 // loop_pre_header
      _
    $region3: #{tpu_custom_call.1} parent=1 // loop_header
      %s20 = sphi 0, %s24
      %p21 = scmp.ge.s32.totalorder %s20, 4
      %s28 = sphi 0, %s28
      %s30 = sphi 0, %s28
      %s31 = sphi 0, %s30
      %s45 = sphi 0, %s31
      %s49 = sphi 0, %s49
      %s51 = sphi 0, %s49
      %s52 = sphi 0, %s51
      %s66 = sphi 0, %s52
      %s70 = sphi 0, %s70
      %s72 = sphi 0, %s70
      %s73 = sphi 0, %s72
      %s87 = sphi 0, %s73
      %s93 = sphi 0, %s95
      %s96 = sphi 0, %s93
      %s97 = sphi 0, %s96
      %s113 = sphi 0, %s97
      %s117 = sphi 0, %s117
      %s119 = sphi 0, %s117
      %s120 = sphi 0, %s119
      %s134 = sphi 0, %s120
      %s138 = sphi 0, %s138
      %s140 = sphi 0, %s138
      %s141 = sphi 0, %s140
      %s155 = sphi 0, %s141
      %s159 = sphi 0, %s159
      %s161 = sphi 0, %s159
      %s162 = sphi 0, %s161
      %s176 = sphi 0, %s162
      %s180 = sphi 0, %s180
      %s182 = sphi 0, %s180
      %s183 = sphi 0, %s182
      %s197 = sphi 0, %s183
    $region4: #{tpu_custom_call.1} parent=1 // loop_header_branch
      %23 = sbr.rel (%p21) target = $region8
    $region5: #{tpu_custom_call.1} parent=1 // loop_body
      %s25 = ssub.s32 %s20, 1
      %s26 = ssub.s32 %s20, 2
      %s27 = sadd.s32 %s20, 1
      %s29 = sadd.s32 %s28, 1
      %p32 = scmp.eq.s32.totalorder %s20, 1
      %p33 = scmp.ne.s32.totalorder %s28, %s30
      %p34 = scmp.eq.s32.totalorder %s20, 0
      %p35 = por %p33, %p34
      %p36 = scmp.ne.s32.totalorder %s28, %s30
      %p37 = scmp.eq.s32.totalorder %s25, 1
      %p38 = por %p36, %p37
      %p39 = scmp.ne.s32.totalorder %s30, %s31
      %p40 = scmp.eq.s32.totalorder %s25, 0
      %p41 = por %p39, %p40
      %p42 = scmp.ne.s32.totalorder %s30, %s31
      %p43 = scmp.eq.s32.totalorder %s26, 1
      %p44 = por %p42, %p43
      %p46 = scmp.ne.s32.totalorder %s31, %s45
      %p47 = scmp.eq.s32.totalorder %s26, 0
      %p48 = por %p46, %p47
      %s50 = sadd.s32 %s49, 1
      %p53 = scmp.eq.s32.totalorder %s20, 1
      %p54 = scmp.ne.s32.totalorder %s49, %s51
      %p55 = scmp.eq.s32.totalorder %s20, 0
      %p56 = por %p54, %p55
      %p57 = scmp.ne.s32.totalorder %s49, %s51
      %p58 = scmp.eq.s32.totalorder %s25, 1
      %p59 = por %p57, %p58
      %p60 = scmp.ne.s32.totalorder %s51, %s52
      %p61 = scmp.eq.s32.totalorder %s25, 0
      %p62 = por %p60, %p61
      %p63 = scmp.ne.s32.totalorder %s51, %s52
      %p64 = scmp.eq.s32.totalorder %s26, 1
      %p65 = por %p63, %p64
      %p67 = scmp.ne.s32.totalorder %s52, %s66
      %p68 = scmp.eq.s32.totalorder %s26, 0
      %p69 = por %p67, %p68
      %s71 = sadd.s32 %s70, 1
      %p74 = scmp.eq.s32.totalorder %s20, 1
      %p75 = scmp.ne.s32.totalorder %s70, %s72
      %p76 = scmp.eq.s32.totalorder %s20, 0
      %p77 = por %p75, %p76
      %p78 = scmp.ne.s32.totalorder %s70, %s72
      %p79 = scmp.eq.s32.totalorder %s25, 1
      %p80 = por %p78, %p79
      %p81 = scmp.ne.s32.totalorder %s72, %s73
      %p82 = scmp.eq.s32.totalorder %s25, 0
      %p83 = por %p81, %p82
      %p84 = scmp.ne.s32.totalorder %s72, %s73
      %p85 = scmp.eq.s32.totalorder %s26, 1
      %p86 = por %p84, %p85
      %p88 = scmp.ne.s32.totalorder %s73, %s87
      %p89 = scmp.eq.s32.totalorder %s26, 0
      %p90 = por %p88, %p89
      %s91 = ssub.s32 %s20, %s27
      %p92 = scmp.eq.s32.totalorder %s91, 0
      %s94 = sadd.s32 %s93, 1
      %s95 = scalar_select %p92, %s93, %s94
      %p98 = pneg %p92
      %p99 = scmp.eq.s32.totalorder %s20, 1
      %p100 = por %p98, %p99
      %p101 = scmp.ne.s32.totalorder %s93, %s96
      %p102 = scmp.eq.s32.totalorder %s20, 0
      %p103 = por %p101, %p102
      %p104 = scmp.ne.s32.totalorder %s93, %s96
      %p105 = scmp.eq.s32.totalorder %s25, 1
      %p106 = por %p104, %p105
      %p107 = scmp.ne.s32.totalorder %s96, %s97
      %p108 = scmp.eq.s32.totalorder %s25, 0
      %p109 = por %p107, %p108
      %p110 = scmp.ne.s32.totalorder %s96, %s97
      %p111 = scmp.eq.s32.totalorder %s26, 1
      %p112 = por %p110, %p111
      %p114 = scmp.ne.s32.totalorder %s97, %s113
      %p115 = scmp.eq.s32.totalorder %s26, 0
      %p116 = por %p114, %p115
      %s118 = sadd.s32 %s117, 1
      %p121 = scmp.eq.s32.totalorder %s20, 1
      %p122 = scmp.ne.s32.totalorder %s117, %s119
      %p123 = scmp.eq.s32.totalorder %s20, 0
      %p124 = por %p122, %p123
      %p125 = scmp.ne.s32.totalorder %s117, %s119
      %p126 = scmp.eq.s32.totalorder %s25, 1
      %p127 = por %p125, %p126
      %p128 = scmp.ne.s32.totalorder %s119, %s120
      %p129 = scmp.eq.s32.totalorder %s25, 0
      %p130 = por %p128, %p129
      %p131 = scmp.ne.s32.totalorder %s119, %s120
      %p132 = scmp.eq.s32.totalorder %s26, 1
      %p133 = por %p131, %p132
      %p135 = scmp.ne.s32.totalorder %s120, %s134
      %p136 = scmp.eq.s32.totalorder %s26, 0
      %p137 = por %p135, %p136
      %s139 = sadd.s32 %s138, 1
      %p142 = scmp.eq.s32.totalorder %s20, 1
      %p143 = scmp.ne.s32.totalorder %s138, %s140
      %p144 = scmp.eq.s32.totalorder %s20, 0
      %p145 = por %p143, %p144
      %p146 = scmp.ne.s32.totalorder %s138, %s140
      %p147 = scmp.eq.s32.totalorder %s25, 1
      %p148 = por %p146, %p147
      %p149 = scmp.ne.s32.totalorder %s140, %s141
      %p150 = scmp.eq.s32.totalorder %s25, 0
      %p151 = por %p149, %p150
      %p152 = scmp.ne.s32.totalorder %s140, %s141
      %p153 = scmp.eq.s32.totalorder %s26, 1
      %p154 = por %p152, %p153
      %p156 = scmp.ne.s32.totalorder %s141, %s155
      %p157 = scmp.eq.s32.totalorder %s26, 0
      %p158 = por %p156, %p157
      %s160 = sadd.s32 %s159, 1
      %p163 = scmp.eq.s32.totalorder %s20, 1
      %p164 = scmp.ne.s32.totalorder %s159, %s161
      %p165 = scmp.eq.s32.totalorder %s20, 0
      %p166 = por %p164, %p165
      %p167 = scmp.ne.s32.totalorder %s159, %s161
      %p168 = scmp.eq.s32.totalorder %s25, 1
      %p169 = por %p167, %p168
      %p170 = scmp.ne.s32.totalorder %s161, %s162
      %p171 = scmp.eq.s32.totalorder %s25, 0
      %p172 = por %p170, %p171
      %p173 = scmp.ne.s32.totalorder %s161, %s162
      %p174 = scmp.eq.s32.totalorder %s26, 1
      %p175 = por %p173, %p174
      %p177 = scmp.ne.s32.totalorder %s162, %s176
      %p178 = scmp.eq.s32.totalorder %s26, 0
      %p179 = por %p177, %p178
      %s181 = sadd.s32 %s180, 1
      %p184 = scmp.eq.s32.totalorder %s20, 1
      %p185 = scmp.ne.s32.totalorder %s180, %s182
      %p186 = scmp.eq.s32.totalorder %s20, 0
      %p187 = por %p185, %p186
      %p188 = scmp.ne.s32.totalorder %s180, %s182
      %p189 = scmp.eq.s32.totalorder %s25, 1
      %p190 = por %p188, %p189
      %p191 = scmp.ne.s32.totalorder %s182, %s183
      %p192 = scmp.eq.s32.totalorder %s25, 0
      %p193 = por %p191, %p192
      %p194 = scmp.ne.s32.totalorder %s182, %s183
      %p195 = scmp.eq.s32.totalorder %s26, 1
      %p196 = por %p194, %p195
      %p198 = scmp.ne.s32.totalorder %s183, %s197
      %p199 = scmp.eq.s32.totalorder %s26, 0
      %p200 = por %p198, %p199
      %p201 = scmp.le.s32.totalorder 1, %s20
      %p202 = scmp.lt.s32.totalorder %s20, 3
      %p203 = pnand %p201, %p202
      %p204 = pneg %p203
      // Predicated region
      $region9: #{tpu_custom_call.1} parent=5 // pred_check
        _
      $region10: #{tpu_custom_call.1} parent=5 // pred_check_branch
        %206 = sbr.rel (%p203) target = $region12
      $region11: #{tpu_custom_call.1} parent=5 // pred_region
        %s207 = ssub.s32 %s20, 1
        // Predicated region
        $region13: #{tpu_custom_call.1} parent=11 // pred_check
          %p208 = pneg %p41
        $region14: #{tpu_custom_call.1} parent=11 // pred_check_branch
          %210 = sbr.rel (%p208) target = $region16
        $region15: #{tpu_custom_call.1} parent=11 // pred_region
          %s212 = ssub.s32 16, 16
          %213 = vsyncadd [#allocation9], %s212
          %s215 = sshll.u32 %s0, 4
          %s216 = int_to_ptr.vmem [resolvable:$true] %s215
          %218 = dma.vmem_to_smem %s216, 16, [#allocation6], [#allocation9]
        $region16: #{tpu_custom_call.1} parent=11 // pred_fallthru
          _
        // Predicated region
        $region17: #{tpu_custom_call.1} parent=11 // pred_check
          %p219 = pneg %p62
        $region18: #{tpu_custom_call.1} parent=11 // pred_check_branch
          %221 = sbr.rel (%p219) target = $region20
        $region19: #{tpu_custom_call.1} parent=11 // pred_region
          _
        $region20: #{tpu_custom_call.1} parent=11 // pred_fallthru
          _
        // Predicated region
        $region21: #{tpu_custom_call.1} parent=11 // pred_check
          %p222 = pneg %p83
        $region22: #{tpu_custom_call.1} parent=11 // pred_check_branch
          %224 = sbr.rel (%p222) target = $region24
        $region23: #{tpu_custom_call.1} parent=11 // pred_region
          %s226 = ssub.s32 64, 64
          %227 = vsyncadd [#allocation7], %s226
          %s229 = sshll.u32 [#allocation10], 4
          %s230 = int_to_ptr.vmem [resolvable:$true] %s229
          %232 = dma.hbm_to_vmem [thread:$0]  %s2, 64, %s230, [#allocation7]
        $region24: #{tpu_custom_call.1} parent=11 // pred_fallthru
          _
        // Predicated region
        $region25: #{tpu_custom_call.1} parent=11 // pred_check
          %p233 = pneg %p130
        $region26: #{tpu_custom_call.1} parent=11 // pred_check_branch
          %235 = sbr.rel (%p233) target = $region28
        $region27: #{tpu_custom_call.1} parent=11 // pred_region
          _
        $region28: #{tpu_custom_call.1} parent=11 // pred_fallthru
          _
        // Predicated region
        $region29: #{tpu_custom_call.1} parent=11 // pred_check
          %p236 = pneg %p151
        $region30: #{tpu_custom_call.1} parent=11 // pred_check_branch
          %238 = sbr.rel (%p236) target = $region32
        $region31: #{tpu_custom_call.1} parent=11 // pred_region
          %s240 = ssub.s32 1024, 1024
          %241 = vsyncadd [#allocation12], %s240
          %s242 = sshll.u32 [#allocation13], 4
          %s243 = int_to_ptr.vmem [resolvable:$true] %s242
          %248 = dma.hbm_to_vmem [thread:$0]  %s5, 1024, %s243, [#allocation12], 64, 64, 4
        $region32: #{tpu_custom_call.1} parent=11 // pred_fallthru
          _
        // Predicated region
        $region33: #{tpu_custom_call.1} parent=11 // pred_check
          %p249 = pneg %p172
        $region34: #{tpu_custom_call.1} parent=11 // pred_check_branch
          %251 = sbr.rel (%p249) target = $region36
        $region35: #{tpu_custom_call.1} parent=11 // pred_region
          _
        $region36: #{tpu_custom_call.1} parent=11 // pred_fallthru
          _
      $region12: #{tpu_custom_call.1} parent=5 // pred_fallthru
        _
      %p252 = scmp.lt.s32.totalorder %s20, 2
      // Predicated region
      $region37: #{tpu_custom_call.1} parent=5 // pred_check
        %p253 = pneg %p252
      $region38: #{tpu_custom_call.1} parent=5 // pred_check_branch
        %255 = sbr.rel (%p253) target = $region40
      $region39: #{tpu_custom_call.1} parent=5 // pred_region
        // Predicated region
        $region41: #{tpu_custom_call.1} parent=39 // pred_check
          %p256 = pneg %p103
        $region42: #{tpu_custom_call.1} parent=39 // pred_check_branch
          %258 = sbr.rel (%p256) target = $region44
        $region43: #{tpu_custom_call.1} parent=39 // pred_region
          %s259 = sand.u32 %s20, 1
          %s260 = scalar_lea.sflag [#allocation12], %s259
          %s261 = sand.u32 %s93, 1
          %s262 = smul.addr %s261, 64
          %s263 = scalar_lea.vmem [#allocation11], %s262
          %s264 = smul.u32 16, %s20
          %s266 = ssub.s32 1024, 1024
          %267 = vsyncadd %s260, %s266
          %s268 = smul.addr %s264, 64
          %s269 = scalar_lea.hbm %s3, %s268
          %s270 = sshll.u32 %s263, 4
          %s271 = int_to_ptr.vmem [resolvable:$true] %s270
          %276 = dma.hbm_to_vmem [thread:$0]  %s269, 1024, %s271, %s260, 64, 64, 4
        $region44: #{tpu_custom_call.1} parent=39 // pred_fallthru
          _
      $region40: #{tpu_custom_call.1} parent=5 // pred_fallthru
        _
      %p277 = scmp.le.s32.totalorder 1, %s20
      %p278 = scmp.lt.s32.totalorder %s20, 3
      %p279 = pnand %p277, %p278
      %p280 = pneg %p279
      // Predicated region
      $region45: #{tpu_custom_call.1} parent=5 // pred_check
        _
      $region46: #{tpu_custom_call.1} parent=5 // pred_check_branch
        %282 = sbr.rel (%p279) target = $region48
      $region47: #{tpu_custom_call.1} parent=5 // pred_region
        %s283 = ssub.s32 %s20, 1
        // Predicated region
        $region49: #{tpu_custom_call.1} parent=47 // pred_check
          %p284 = pneg %p41
        $region50: #{tpu_custom_call.1} parent=47 // pred_check_branch
          %286 = sbr.rel (%p284) target = $region52
        $region51: #{tpu_custom_call.1} parent=47 // pred_region
          %287 = dma.done [#allocation9], 16
        $region52: #{tpu_custom_call.1} parent=47 // pred_fallthru
          _
        // Predicated region
        $region53: #{tpu_custom_call.1} parent=47 // pred_check
          %p288 = pneg %p83
        $region54: #{tpu_custom_call.1} parent=47 // pred_check_branch
          %290 = sbr.rel (%p288) target = $region56
        $region55: #{tpu_custom_call.1} parent=47 // pred_region
          %291 = dma.done [#allocation7], 64
        $region56: #{tpu_custom_call.1} parent=47 // pred_fallthru
          _
        %s292 = sand.u32 %s25, 1
        %s293 = scalar_lea.sflag [#allocation12], %s292
        %s294 = sand.u32 %s96, 1
        %s295 = smul.addr %s294, 64
        %s296 = scalar_lea.vmem [#allocation11], %s295
        // Predicated region
        $region57: #{tpu_custom_call.1} parent=47 // pred_check
          %p297 = pneg %p109
        $region58: #{tpu_custom_call.1} parent=47 // pred_check_branch
          %299 = sbr.rel (%p297) target = $region60
        $region59: #{tpu_custom_call.1} parent=47 // pred_region
          %300 = dma.done %s293, 1024
        $region60: #{tpu_custom_call.1} parent=47 // pred_fallthru
          _
        // Predicated region
        $region61: #{tpu_custom_call.1} parent=47 // pred_check
          %p301 = pneg %p151
        $region62: #{tpu_custom_call.1} parent=47 // pred_check_branch
          %303 = sbr.rel (%p301) target = $region64
        $region63: #{tpu_custom_call.1} parent=47 // pred_region
          %304 = dma.done [#allocation12], 1024
        $region64: #{tpu_custom_call.1} parent=47 // pred_fallthru
          _
        %305 = sfence
        %p306 = pneg %p41
        %p307 = pneg %p38
        %p308 = pneg %p62
        %p309 = pneg %p59
        %p310 = pneg %p83
        %p311 = pneg %p80
        %s312 = sand.u32 %s25, 1
        %s313 = scalar_lea.sflag [#allocation12], %s312
        %s314 = sand.u32 %s96, 1
        %s315 = smul.addr %s314, 64
        %s316 = scalar_lea.vmem [#allocation11], %s315
        %p317 = pneg %p109
        %p318 = pneg %p106
        %p319 = pneg %p130
        %p320 = pneg %p127
        %p321 = pneg %p151
        %p322 = pneg %p148
        %p323 = pneg %p172
        %p324 = pneg %p169
        %p325 = pneg %p193
        %p326 = pneg %p190
        %s327 = smul.u32 16, %s25
        %p329 = scmp.eq.s32.totalorder %s25, 0
        // Predicated region
        $region65: #{tpu_custom_call.1} parent=47 // pred_check
          %p330 = pneg %p329
        $region66: #{tpu_custom_call.1} parent=47 // pred_check_branch
          %332 = sbr.rel (%p330) target = $region68
        $region67: #{tpu_custom_call.1} parent=47 // pred_region
          %333 = vst [vmem:[#allocation2] sm:$0xff] 0.0
          %334 = vst [vmem:[#allocation2 + $0x8] sm:$0xff] 0.0
          %335 = vst [vmem:[#allocation2 + $0x10] sm:$0xff] 0.0
          %336 = vst [vmem:[#allocation2 + $0x18] sm:$0xff] 0.0
          %v337 = vld [vmem:[#allocation10] sm:$0xf]
          %v340 = vunpack.c.l.s4 1983009808
          %v341 = vunpack.c.0.s8 %v340
          %v342 = vlaneseq
          %v343 = vshrl.u32 %v342, 7
          %v344 = vsub.s32 %v341, %v343
          %v345 = vrot.slane %v337, %v344
          %v346 = vcombine.high %v345, %v345
          %v347 = vrot.slane %v345, 7
          %v348 = vrot.slane %v346, 7
          %351 = vst [vmem:[#allocation2] sm:$0x6] %v347
          %352 = vst [vmem:[#allocation2 + $0x8] sm:$0x6] %v348
          %v353 = vld [vmem:[#allocation2] sm:$0xff]
          %v354 = vld [vmem:[#allocation2 + $0x8] sm:$0xff]
          %v355 = vld [vmem:[#allocation2] sm:$0xfe]
          %v356 = vld [vmem:[#allocation2 + $0x8] sm:$0xfe]
          %v357 = vld [vmem:[#allocation2 + $0x10] sm:$0x1]
          %v358 = vld [vmem:[#allocation2 + $0x18] sm:$0x1]
          %v359 = vld [vmem:[#allocation2] sm:$0xfc]
          %v360 = vld [vmem:[#allocation2 + $0x8] sm:$0xfc]
          %v361 = vld [vmem:[#allocation2 + $0x10] sm:$0x3]
          %v362 = vld [vmem:[#allocation2 + $0x18] sm:$0x3]
          %s363 = sld [smem:[#allocation6]]
          %v364 = vstv %s363
          %v365 = vmul.f32 %v364, %v353
          %v366 = vmul.f32 %v364, %v354
          %s367 = sld [smem:[#allocation6 + $0x3]]
          %v368 = vstv %s367
          %v369 = vmul.f32 %v368, %v355
          %v370 = vmul.f32 %v368, %v356
          %v371 = vmul.f32 %v368, %v357
          %v372 = vmul.f32 %v368, %v358
          %vm377 = vcmask 1046528
          %v378 = vrot.slane %v369, 1
          %v379 = vrot.slane %v371, 1
          %v380 = vsel %vm377, %v378, %v379
          %v381 = vrot.slane %v370, 1
          %v382 = vrot.slane %v372, 1
          %v383 = vsel %vm377, %v381, %v382
          %v386 = vadd.f32 %v365, %v380
          %v387 = vadd.f32 %v366, %v383
          %s388 = sld [smem:[#allocation6 + $0x6]]
          %v389 = vstv %s388
          %v390 = vmul.f32 %v389, %v359
          %v391 = vmul.f32 %v389, %v360
          %v392 = vmul.f32 %v389, %v361
          %v393 = vmul.f32 %v389, %v362
          %vm398 = vcmask 1045504
          %v399 = vrot.slane %v390, 2
          %v400 = vrot.slane %v392, 2
          %v401 = vsel %vm398, %v399, %v400
          %v402 = vrot.slane %v391, 2
          %v403 = vrot.slane %v393, 2
          %v404 = vsel %vm398, %v402, %v403
          %v407 = vadd.f32 %v386, %v401
          %v408 = vadd.f32 %v387, %v404
          %s409 = sld [smem:[#allocation6 + $0x1]]
          %v410 = vstv %s409
          %v411 = vmul.f32 %v410, %v353
          %v412 = vmul.f32 %v410, %v354
          %s413 = sld [smem:[#allocation6 + $0x4]]
          %v414 = vstv %s413
          %v415 = vmul.f32 %v414, %v355
          %v416 = vmul.f32 %v414, %v356
          %v417 = vmul.f32 %v414, %v357
          %v418 = vmul.f32 %v414, %v358
          %v423 = vrot.slane %v415, 1
          %v424 = vrot.slane %v417, 1
          %v425 = vsel %vm377, %v423, %v424
          %v426 = vrot.slane %v416, 1
          %v427 = vrot.slane %v418, 1
          %v428 = vsel %vm377, %v426, %v427
          %v431 = vadd.f32 %v411, %v425
          %v432 = vadd.f32 %v412, %v428
          %s433 = sld [smem:[#allocation6 + $0x7]]
          %v434 = vstv %s433
          %v435 = vmul.f32 %v434, %v359
          %v436 = vmul.f32 %v434, %v360
          %v437 = vmul.f32 %v434, %v361
          %v438 = vmul.f32 %v434, %v362
          %v443 = vrot.slane %v435, 2
          %v444 = vrot.slane %v437, 2
          %v445 = vsel %vm398, %v443, %v444
          %v446 = vrot.slane %v436, 2
          %v447 = vrot.slane %v438, 2
          %v448 = vsel %vm398, %v446, %v447
          %v451 = vadd.f32 %v431, %v445
          %v452 = vadd.f32 %v432, %v448
          %s453 = sld [smem:[#allocation6 + $0x2]]
          %v454 = vstv %s453
          %v455 = vmul.f32 %v454, %v353
          %v456 = vmul.f32 %v454, %v354
          %s457 = sld [smem:[#allocation6 + $0x5]]
          %v458 = vstv %s457
          %v459 = vmul.f32 %v458, %v355
          %v460 = vmul.f32 %v458, %v356
          %v461 = vmul.f32 %v458, %v357
          %v462 = vmul.f32 %v458, %v358
          %v467 = vrot.slane %v459, 1
          %v468 = vrot.slane %v461, 1
          %v469 = vsel %vm377, %v467, %v468
          %v470 = vrot.slane %v460, 1
          %v471 = vrot.slane %v462, 1
          %v472 = vsel %vm377, %v470, %v471
          %v475 = vadd.f32 %v455, %v469
          %v476 = vadd.f32 %v456, %v472
          %s477 = sld [smem:[#allocation6 + $0x8]]
          %v478 = vstv %s477
          %v479 = vmul.f32 %v478, %v359
          %v480 = vmul.f32 %v478, %v360
          %v481 = vmul.f32 %v478, %v361
          %v482 = vmul.f32 %v478, %v362
          %v487 = vrot.slane %v479, 2
          %v488 = vrot.slane %v481, 2
          %v489 = vsel %vm398, %v487, %v488
          %v490 = vrot.slane %v480, 2
          %v491 = vrot.slane %v482, 2
          %v492 = vsel %vm398, %v490, %v491
          %v495 = vadd.f32 %v475, %v489
          %v496 = vadd.f32 %v476, %v492
          %v497 = vlaneseq
          %v498 = vand.u32 %v497, 127
          %v499 = vadd.s32 %v498, 128
          %vm500 = vcmp.eq.s32.totalorder %v498, 0
          %vm501 = vcmp.eq.s32.totalorder %v499, 0
          %502 = vrot.lane.b32.xlu0 %v407, 1
          %v503 = vpop.permute.xlu0 %502
          %504 = vrot.lane.b32.xlu0 %v408, 1
          %v505 = vpop.permute.xlu0 %504
          %vm506 = vcmp.lt.s32.totalorder %v498, 1
          %v507 = vsel %vm506, %v503, %v505
          %v508 = vsel %vm506, %v505, %v503
          %v509 = vsel %vm500, 0.0, %v508
          %v510 = vsel %vm501, 0.0, %v507
          %vm511 = vcmp.eq.s32.totalorder %v498, 255
          %vm512 = vcmp.eq.s32.totalorder %v499, 255
          %513 = vrot.lane.b32.xlu0 %v495, 127
          %v514 = vpop.permute.xlu0 %513
          %515 = vrot.lane.b32.xlu0 %v496, 127
          %v516 = vpop.permute.xlu0 %515
          %vm517 = vcmp.lt.s32.totalorder %v498, 127
          %v518 = vsel %vm517, %v514, %v516
          %v519 = vsel %vm517, %v516, %v514
          %v520 = vsel %vm511, 0.0, %v518
          %v521 = vsel %vm512, 0.0, %v519
          %v522 = vadd.f32 %v509, %v451
          %v523 = vadd.f32 %v510, %v452
          %v524 = vadd.f32 %v522, %v520
          %v525 = vadd.f32 %v523, %v521
          %s526 = sld [smem:[#allocation5]]
          %v527 = vstv %s526
          %v528 = vadd.f32 %v524, %v527
          %v529 = vadd.f32 %v525, %v527
          %v530 = vpack.c.bf16 %v528, %v528
          %v531 = vpack.c.bf16 %v529, %v529
          %v534 = vunpack.c.l.b16 %v530
          %v535 = vunpack.c.l.b16 %v531
          %v536 = vpack.c.b16 %v535, %v534
          %538 = vst [vmem:[#allocation3] sm:$0xff] %v536
          %539 = vst [vmem:[#allocation4] sm:$0xff] 0.0
        $region68: #{tpu_custom_call.1} parent=47 // pred_fallthru
          _
        %s540 = smul.u32 %s25, 128
        %v541 = vld [vmem:[#allocation4] sm:$0xff]
        %s542 = sshra.s32 %s540, 7
        %s543 = sand.u32 %s540, 127
        %s544 = smul.addr %s542, 4
        %s545 = scalar_lea.vmem [#allocation3], %s544
        %v546 = vld [vmem:[%s545] sm:$0xf]
        %v547 = vld [vmem:[%s296] sm:$0xf]
        %v548 = vld [vmem:[%s296 + $0x4] sm:$0xf]
        %v549 = vld [vmem:[%s296 + $0x8] sm:$0xf]
        %v550 = vld [vmem:[%s296 + $0xc] sm:$0xf]
        %v551 = vld [vmem:[%s296 + $0x10] sm:$0xf]
        %v552 = vld [vmem:[%s296 + $0x14] sm:$0xf]
        %v553 = vld [vmem:[%s296 + $0x18] sm:$0xf]
        %v554 = vld [vmem:[%s296 + $0x1c] sm:$0xf]
        %v555 = vld [vmem:[%s296 + $0x20] sm:$0xf]
        %v556 = vld [vmem:[%s296 + $0x24] sm:$0xf]
        %v557 = vld [vmem:[%s296 + $0x28] sm:$0xf]
        %v558 = vld [vmem:[%s296 + $0x2c] sm:$0xf]
        %v559 = vld [vmem:[%s296 + $0x30] sm:$0xf]
        %v560 = vld [vmem:[%s296 + $0x34] sm:$0xf]
        %v561 = vld [vmem:[%s296 + $0x38] sm:$0xf]
        %v562 = vld [vmem:[%s296 + $0x3c] sm:$0xf]
        %v579 = vunpack.c.l.b16 %v547
        %v580 = vunpack.c.l.b16 %v548
        %v581 = vunpack.c.l.b16 %v549
        %v582 = vunpack.c.l.b16 %v550
        %v583 = vunpack.c.l.b16 %v551
        %v584 = vunpack.c.l.b16 %v552
        %v585 = vunpack.c.l.b16 %v553
        %v586 = vunpack.c.l.b16 %v554
        %v587 = vunpack.c.l.b16 %v555
        %v588 = vunpack.c.l.b16 %v556
        %v589 = vunpack.c.l.b16 %v557
        %v590 = vunpack.c.l.b16 %v558
        %v591 = vunpack.c.l.b16 %v559
        %v592 = vunpack.c.l.b16 %v560
        %v593 = vunpack.c.l.b16 %v561
        %v594 = vunpack.c.l.b16 %v562
        %v595 = vpack.c.b16 %v580, %v579
        %v596 = vpack.c.b16 %v582, %v581
        %v597 = vpack.c.b16 %v584, %v583
        %v598 = vpack.c.b16 %v586, %v585
        %v599 = vpack.c.b16 %v588, %v587
        %v600 = vpack.c.b16 %v590, %v589
        %v601 = vpack.c.b16 %v592, %v591
        %v602 = vpack.c.b16 %v594, %v593
        %611 = vmatprep.subr.bf16.mxu0 0
        %612 = vmatpush1.bf16.msra.mxu0 %v602
        %613 = vmatprep.subr.bf16.mxu0 0
        %614 = vmatpush1.bf16.msra.mxu0 %v601
        %615 = vmatprep.subr.bf16.mxu0 0
        %616 = vmatpush1.bf16.msra.mxu0 %v600
        %617 = vmatprep.subr.bf16.mxu0 0
        %618 = vmatpush1.bf16.msra.mxu0 %v599
        %619 = vmatprep.subr.bf16.mxu0 0
        %620 = vmatpush1.bf16.msra.mxu0 %v598
        %621 = vmatprep.subr.bf16.mxu0 0
        %622 = vmatpush1.bf16.msra.mxu0 %v597
        %623 = vmatprep.subr.bf16.mxu0 0
        %624 = vmatpush1.bf16.msra.mxu0 %v596
        %625 = vmatprep.subr.bf16.mxu0 0
        %626 = vmatpush1.bf16.msra.mxu0 %v595
        %627 = vmatprep.subr.bf16.mxu0 0
        %628 = vmatpush2.bf16.msra.mxu0 0
        %629 = vmatprep.subr.bf16.mxu0 0
        %630 = vmatpush2.bf16.msra.mxu0 0
        %631 = vmatprep.subr.bf16.mxu0 0
        %632 = vmatpush2.bf16.msra.mxu0 0
        %633 = vmatprep.subr.bf16.mxu0 0
        %634 = vmatpush2.bf16.msra.mxu0 0
        %635 = vmatprep.subr.bf16.mxu0 0
        %636 = vmatpush2.bf16.msra.mxu0 0
        %637 = vmatprep.subr.bf16.mxu0 0
        %638 = vmatpush2.bf16.msra.mxu0 0
        %639 = vmatprep.subr.bf16.mxu0 0
        %640 = vmatpush2.bf16.msra.mxu0 0
        %641 = vmatprep.subr.bf16.mxu0 0
        %642 = vmatpush2.bf16.msra.mxu0 0
        %643 = vmatprep.mubr.bf16.mxu0 0
        %644 = vmatmul.mubr.bf16.gmra.mxu0 %v546
        %v645 = vpop.f32.mrf.mxu0
        %v646 = vadd.f32 0.0, %v645
        %v647 = vpop.f32.mrf.mxu0
        %v648 = vpop.f32.mrf.mxu0
        %v649 = vpop.f32.mrf.mxu0
        %650 = vdwg.mxu0
        %v651 = vadd.f32 %v541, %v646
        %652 = vst [vmem:[#allocation4] sm:$0xff] %v651
        %p653 = scmp.eq.s32.totalorder %s25, 1
        // Predicated region
        $region69: #{tpu_custom_call.1} parent=47 // pred_check
          %p654 = pneg %p653
        $region70: #{tpu_custom_call.1} parent=47 // pred_check_branch
          %656 = sbr.rel (%p654) target = $region72
        $region71: #{tpu_custom_call.1} parent=47 // pred_region
          %v657 = vld [vmem:[#allocation4] sm:$0xff]
          %v658 = vld [vmem:[%s4] sm:$0x1]
          %v660 = vlaneseq
          %v661 = vshrl.u32 %v660, 7
          %v662 = vsub.s32 0, %v661
          %v663 = vrot.slane %v658, %v662
          %v665 = vadd.f32 %v657, %v663
          %v666 = vmax.f32 %v665, 0.0
          %v667 = vpack.c.bf16 %v666, %v666
          %v668 = vld [vmem:[#allocation13] sm:$0xf]
          %v669 = vld [vmem:[#allocation13 + $0x4] sm:$0xf]
          %v670 = vld [vmem:[#allocation13 + $0x8] sm:$0xf]
          %v671 = vld [vmem:[#allocation13 + $0xc] sm:$0xf]
          %v672 = vld [vmem:[#allocation13 + $0x10] sm:$0xf]
          %v673 = vld [vmem:[#allocation13 + $0x14] sm:$0xf]
          %v674 = vld [vmem:[#allocation13 + $0x18] sm:$0xf]
          %v675 = vld [vmem:[#allocation13 + $0x1c] sm:$0xf]
          %v676 = vld [vmem:[#allocation13 + $0x20] sm:$0xf]
          %v677 = vld [vmem:[#allocation13 + $0x24] sm:$0xf]
          %v678 = vld [vmem:[#allocation13 + $0x28] sm:$0xf]
          %v679 = vld [vmem:[#allocation13 + $0x2c] sm:$0xf]
          %v680 = vld [vmem:[#allocation13 + $0x30] sm:$0xf]
          %v681 = vld [vmem:[#allocation13 + $0x34] sm:$0xf]
          %v682 = vld [vmem:[#allocation13 + $0x38] sm:$0xf]
          %v683 = vld [vmem:[#allocation13 + $0x3c] sm:$0xf]
          %v684 = vld [vmem:[%s6] sm:$0x1]
          %v686 = vlaneseq
          %v687 = vshrl.u32 %v686, 7
          %v688 = vsub.s32 0, %v687
          %v689 = vrot.slane %v684, %v688
          %v707 = vunpack.c.l.b16 %v668
          %v708 = vunpack.c.l.b16 %v669
          %v709 = vunpack.c.l.b16 %v670
          %v710 = vunpack.c.l.b16 %v671
          %v711 = vunpack.c.l.b16 %v672
          %v712 = vunpack.c.l.b16 %v673
          %v713 = vunpack.c.l.b16 %v674
          %v714 = vunpack.c.l.b16 %v675
          %v715 = vunpack.c.l.b16 %v676
          %v716 = vunpack.c.l.b16 %v677
          %v717 = vunpack.c.l.b16 %v678
          %v718 = vunpack.c.l.b16 %v679
          %v719 = vunpack.c.l.b16 %v680
          %v720 = vunpack.c.l.b16 %v681
          %v721 = vunpack.c.l.b16 %v682
          %v722 = vunpack.c.l.b16 %v683
          %v723 = vpack.c.b16 %v708, %v707
          %v724 = vpack.c.b16 %v710, %v709
          %v725 = vpack.c.b16 %v712, %v711
          %v726 = vpack.c.b16 %v714, %v713
          %v727 = vpack.c.b16 %v716, %v715
          %v728 = vpack.c.b16 %v718, %v717
          %v729 = vpack.c.b16 %v720, %v719
          %v730 = vpack.c.b16 %v722, %v721
          %739 = vmatprep.subr.bf16.mxu0 0
          %740 = vmatpush1.bf16.msra.mxu0 %v730
          %741 = vmatprep.subr.bf16.mxu0 0
          %742 = vmatpush1.bf16.msra.mxu0 %v729
          %743 = vmatprep.subr.bf16.mxu0 0
          %744 = vmatpush1.bf16.msra.mxu0 %v728
          %745 = vmatprep.subr.bf16.mxu0 0
          %746 = vmatpush1.bf16.msra.mxu0 %v727
          %747 = vmatprep.subr.bf16.mxu0 0
          %748 = vmatpush1.bf16.msra.mxu0 %v726
          %749 = vmatprep.subr.bf16.mxu0 0
          %750 = vmatpush1.bf16.msra.mxu0 %v725
          %751 = vmatprep.subr.bf16.mxu0 0
          %752 = vmatpush1.bf16.msra.mxu0 %v724
          %753 = vmatprep.subr.bf16.mxu0 0
          %754 = vmatpush1.bf16.msra.mxu0 %v723
          %755 = vmatprep.subr.bf16.mxu0 0
          %756 = vmatpush2.bf16.msra.mxu0 0
          %757 = vmatprep.subr.bf16.mxu0 0
          %758 = vmatpush2.bf16.msra.mxu0 0
          %759 = vmatprep.subr.bf16.mxu0 0
          %760 = vmatpush2.bf16.msra.mxu0 0
          %761 = vmatprep.subr.bf16.mxu0 0
          %762 = vmatpush2.bf16.msra.mxu0 0
          %763 = vmatprep.subr.bf16.mxu0 0
          %764 = vmatpush2.bf16.msra.mxu0 0
          %765 = vmatprep.subr.bf16.mxu0 0
          %766 = vmatpush2.bf16.msra.mxu0 0
          %767 = vmatprep.subr.bf16.mxu0 0
          %768 = vmatpush2.bf16.msra.mxu0 0
          %769 = vmatprep.subr.bf16.mxu0 0
          %770 = vmatpush2.bf16.msra.mxu0 0
          %771 = vmatprep.mubr.bf16.mxu0 0
          %772 = vmatmul.mubr.bf16.gmra.mxu0 %v667
          %v773 = vpop.f32.mrf.mxu0
          %v774 = vadd.f32 %v689, %v773
          %v775 = vpop.f32.mrf.mxu0
          %v776 = vpop.f32.mrf.mxu0
          %v777 = vpop.f32.mrf.mxu0
          %778 = vdwg.mxu0
          %v779 = vlaneseq
          %v780 = vand.u32 %v779, 127
          %vm781 = vcmp.lt.s32.totalorder %v780, 26
          %v782 = vsel %vm781, %v774, -inf
          %783 = vmax.xlane.f32.xlu0 %v782
          %v784 = vpop.xlane.xlu0 %783
          %v785 = vsub.f32 %v782, %v784
          %v786 = vmul.f32 %v785, 1.442695
          %v787 = vpow.pop %v786
          %788 = vadd.xlane.f32.xlu0 %v787
          %v789 = vpop.xlane.xlu0 %788
          %v790 = vlog2.pop %v789
          %v791 = vmul.f32 %v790, 0.6931472
          %v792 = vsub.f32 %v785, %v791
          %793 = vst [vmem:[#allocation14] sm:$0xff] %v792
        $region72: #{tpu_custom_call.1} parent=47 // pred_fallthru
          _
        // Predicated region
        $region73: #{tpu_custom_call.1} parent=47 // pred_check
          %p794 = pneg %p190
        $region74: #{tpu_custom_call.1} parent=47 // pred_check_branch
          %796 = sbr.rel (%p794) target = $region76
        $region75: #{tpu_custom_call.1} parent=47 // pred_region
          %s798 = ssub.s32 128, 128
          %799 = vsyncadd [#allocation8], %s798
          %s801 = sshll.u32 [#allocation14], 4
          %s802 = int_to_ptr.vmem [resolvable:$true] %s801
          %804 = dma.vmem_to_hbm [thread:$0]  %s802, 128, %s7, [#allocation8]
        $region76: #{tpu_custom_call.1} parent=47 // pred_fallthru
          _
        // Predicated region
        $region77: #{tpu_custom_call.1} parent=47 // pred_check
          %p805 = pneg %p190
        $region78: #{tpu_custom_call.1} parent=47 // pred_check_branch
          %807 = sbr.rel (%p805) target = $region80
        $region79: #{tpu_custom_call.1} parent=47 // pred_region
          %808 = dma.done [#allocation8], 128
        $region80: #{tpu_custom_call.1} parent=47 // pred_fallthru
          _
      $region48: #{tpu_custom_call.1} parent=5 // pred_fallthru
        _
      %p809 = scmp.le.s32.totalorder 2, %s20
      // Predicated region
      $region81: #{tpu_custom_call.1} parent=5 // pred_check
        %p810 = pneg %p809
      $region82: #{tpu_custom_call.1} parent=5 // pred_check_branch
        %812 = sbr.rel (%p810) target = $region84
      $region83: #{tpu_custom_call.1} parent=5 // pred_region
        %s813 = ssub.s32 %s20, 2
      $region84: #{tpu_custom_call.1} parent=5 // pred_fallthru
        _
    $region6: #{tpu_custom_call.1} parent=1 // loop_footer
      %s24 = sadd.s32 1, %s20
    $region7: #{tpu_custom_call.1} parent=1 // loop_footer_branch
      %19 = sbr.rel target = $region3
    $region8: #{tpu_custom_call.1} parent=1 // loop_exit
      _
    %814 = vsyncpa [#allocation7], 1
    %s815 = scalar_lea.sflag [#allocation7], 1
    %816 = vsyncpa %s815, 1
    %817 = vsyncpa [#allocation12], 1
    %s818 = scalar_lea.sflag [#allocation12], 1
    %819 = vsyncpa %s818, 1
    %820 = vsyncpa [#allocation8], 1
    %s821 = scalar_lea.sflag [#allocation8], 1
    %822 = vsyncpa %s821, 1
    %823 = vsyncpa [#allocation9], 1
    %s824 = scalar_lea.sflag [#allocation9], 1
    %825 = vsyncpa %s824, 1

</llo_original>
